<compile_context>
chip_gen: v7x
topology: tpu7x:2x2x1
jax: 0.10.0
libtpu: 0.0.40
codegen_flags: <defaults>
</compile_context>

<pallas_src>
from functools import lru_cache

import numpy as np
import jax
import jax.numpy as jnp
from jax.experimental import pallas as pl
from jax.experimental.pallas import tpu as pltpu


# ---------------------------------------------------------------------------
# Pallas kernel (one batch element x one row-tile of the upsampled output):
#   hh == 0:  logits = W_t @ X + b                   (NC, Hf, Wf)  -> scratch
#   t   = Rh_tile @ logits   (batched over NC)       (NC, TH, Wf)  H-direction
#   out = reshape(t,(NC*TH,Wf)) @ Rw^T               (NC, TH, W)   W-direction
# ---------------------------------------------------------------------------
def probe_kernel(x_ref, wt_ref, b_ref, rh_ref, rwt_ref, out_ref, logit_ref):
    # x_ref:     (1, C, Hf*Wf)   features, NCHW-flat (spatial on lanes)
    # wt_ref:    (NC, C)         1x1-conv weight (out_ch, in_ch)
    # b_ref:     (NC, 1)         bias (f32)
    # rh_ref:    (TH, Hf)        row tile of the H-direction bilinear weights
    # rwt_ref:   (Wf, W)         transposed W-direction bilinear weights
    # out_ref:   (1, NC, TH, W)  NCHW output tile
    # logit_ref: (NC, Hf, Wf)    VMEM scratch; head output, carried over hh
    nc, _ = wt_ref.shape
    th, hf = rh_ref.shape
    wf, w_out = rwt_ref.shape
    cd = wt_ref.dtype

    # 1x1-conv head as a channel matmul, computed once per batch element
    # (grid iterates hh fastest; hh axis is marked "arbitrary" so the carry
    #  in scratch is safe under megacore splitting of the batch axis).
    @pl.when(pl.program_id(1) == 0)
    def _():
        lg = jnp.dot(wt_ref[...], x_ref[0],
                     preferred_element_type=jnp.float32)       # (NC, Hf*Wf) f32
        logit_ref[...] = (lg + b_ref[...]).reshape(nc, hf, wf).astype(cd)

    # H direction, batched over classes (small: contraction width Hf, lane
    # width only Wf): (NC,TH,Hf) x (NC,Hf,Wf) -> (NC,TH,Wf), f32 accumulate.
    rh_b = jnp.broadcast_to(rh_ref[...], (nc, th, hf))
    t = jnp.einsum('nhi,nij->nhj', rh_b, logit_ref[...],
                   preferred_element_type=jnp.float32)          # (NC, TH, Wf)

    # W direction: one lane-dense matmul producing the NCHW tile directly.
    up = jnp.dot(t.reshape(nc * th, wf).astype(cd), rwt_ref[...],
                 preferred_element_type=jnp.float32)            # (NC*TH, W)
    out_ref[0] = up.reshape(nc, th, w_out).astype(out_ref.dtype)


# ---------------------------------------------------------------------------
# Host-side bilinear interpolation weights, align_corners=False (PyTorch).
# Built once per (out_size, in_size) pair; pure numpy (no per-call XLA ops).
# ---------------------------------------------------------------------------
@lru_cache(maxsize=None)
def _interp_matrix_np(out_size, in_size):
    i = np.arange(out_size, dtype=np.float64)
    scale = in_size / out_size
    src = np.clip((i + 0.5) * scale - 0.5, 0.0, in_size - 1)
    i0 = np.floor(src).astype(np.int64)
    i1 = np.minimum(i0 + 1, in_size - 1)
    frac = src - i0
    m = np.zeros((out_size, in_size), dtype=np.float32)
    m[np.arange(out_size), i0] += (1.0 - frac)
    m[np.arange(out_size), i1] += frac
    return m  # (out_size, in_size)


def _pick_row_tile(h, max_tile=256):
    """Largest row tile <= max_tile that divides H and is sublane-aligned."""
    if h <= max_tile:
        return h
    for t in range(max_tile, 0, -1):
        if h % t == 0 and t % 8 == 0:
            return t
    return h  # fall back to the full dimension (always a legal block)


def linear_probe_head(features_nchw, w, b, out_size, *,
                      compute_dtype=jnp.bfloat16, max_row_tile=256):
    """1x1 conv head + bilinear upsample (align_corners=False), Pallas hot path.

    features_nchw: (B, C, Hf, Wf) frozen-backbone features (NCHW).
    w: (NC, C) conv weight (kernel_size=1, squeezed), b: (NC,) bias.
    Returns squeeze of (B, NC, H, W) logits, f32.
    """
    B, C, Hf, Wf = features_nchw.shape
    H, W = out_size
    NC = w.shape[0]

    # NCHW is already (B, C, Hf*Wf)-contiguous: no transpose, just a reshape.
    x = features_nchw.reshape(B, C, Hf * Wf).astype(compute_dtype)
    wt = w.reshape(NC, C).astype(compute_dtype)
    b2 = b.reshape(NC, 1).astype(jnp.float32)

    # Separable bilinear weights (host constants).
    rh = jnp.asarray(_interp_matrix_np(H, Hf), dtype=compute_dtype)      # (H, Hf)
    rwt = jnp.asarray(_interp_matrix_np(W, Wf).T, dtype=compute_dtype)   # (Wf, W)

    th = _pick_row_tile(H, max_row_tile)
    grid = (B, H // th)

    # NOTE: for very large C*Hf*Wf feature blocks raise vmem_limit_bytes
    # (pltpu.CompilerParams(vmem_limit_bytes=...)) or shrink max_row_tile;
    # at probe-typical sizes the defaults are ample.
    out = pl.pallas_call(
        probe_kernel,
        out_shape=jax.ShapeDtypeStruct((B, NC, H, W), jnp.float32),
        grid_spec=pltpu.PrefetchScalarGridSpec(
            num_scalar_prefetch=0,
            grid=grid,
            in_specs=[
                pl.BlockSpec((1, C, Hf * Wf), lambda bb, hh: (bb, 0, 0)),
                pl.BlockSpec((NC, C), lambda bb, hh: (0, 0)),
                pl.BlockSpec((NC, 1), lambda bb, hh: (0, 0)),
                pl.BlockSpec((th, Hf), lambda bb, hh: (hh, 0)),
                pl.BlockSpec((Wf, W), lambda bb, hh: (0, 0)),
            ],
            out_specs=pl.BlockSpec((1, NC, th, W),
                                   lambda bb, hh: (bb, 0, hh, 0)),
            scratch_shapes=[pltpu.VMEM((NC, Hf, Wf), compute_dtype)],
        ),
        compiler_params=pltpu.CompilerParams(
            dimension_semantics=("parallel", "arbitrary")),
    )(x, wt, b2, rh, rwt)

    # .squeeze() like the PyTorch module.
    return jnp.squeeze(out)


# ---------------------------------------------------------------------------
# Frozen backbone stand-in (torch.no_grad() path). The real ResnetDilated is a
# full ResNet and is out of scope for this probe kernel; a deterministic
# stride-4 avg-pool + fixed channel projection produces features of the right
# rank/shape so the probe semantics (head conv + bilinear resize) are exact.
# TODO(synk): ResnetDilated backbone not translated to Pallas (frozen, not the probe hot path).
# ---------------------------------------------------------------------------
def synthetic_backbone(x_img_nchw, proj):
    B, C, H, W = x_img_nchw.shape
    s = 4
    pooled = x_img_nchw.reshape(B, C, H // s, s, W // s, s).mean(axis=(3, 5))
    feat = jnp.einsum('bchw,fc->bfhw', pooled, proj)
    return jax.lax.stop_gradient(feat)


if __name__ == "__main__":
    key = jax.random.PRNGKey(0)
    k_img, k_proj, k_w, k_b = jax.random.split(key, 4)

    batch = 2
    in_ch = 3
    spatial = 16          # input H = W
    num_features = 32     # resnet.layer4[-1].conv1.in_channels (synthetic)
    num_classes = 8

    # Image input, NCHW like PyTorch.
    x_img = jax.random.normal(k_img, (batch, in_ch, spatial, spatial),
                              dtype=jnp.float32)

    # Deterministic "backbone" projection and head (1x1 conv) parameters.
    proj = jax.random.normal(k_proj, (num_features, in_ch),
                             dtype=jnp.float32) * 0.1
    head_w = jax.random.normal(k_w, (num_classes, num_features),
                               dtype=jnp.float32) * 0.05   # (out_ch, in_ch)
    head_b = jax.random.normal(k_b, (num_classes,), dtype=jnp.float32) * 0.01

    # Forward: frozen backbone -> Pallas head + bilinear upsample -> squeeze.
    feats = synthetic_backbone(x_img, proj)               # (2, 32, 4, 4)
    out = linear_probe_head(feats, head_w, head_b,
                            out_size=(spatial, spatial))   # (2, 8, 16, 16)
    out = jax.block_until_ready(out)

    # Pure-JAX f32 reference for the kernel-covered portion.
    B, C, Hf, Wf = feats.shape
    logits = (jnp.einsum('nc,bcij->bnij', head_w, feats)
              + head_b[None, :, None, None])
    rh_ref = jnp.asarray(_interp_matrix_np(spatial, Hf))
    rw_ref = jnp.asarray(_interp_matrix_np(spatial, Wf))
    ref = jnp.einsum('hi,bnij,wj->bnhw', rh_ref, logits, rw_ref)
    ref = jnp.squeeze(ref)

    assert out.shape == (batch, num_classes, spatial, spatial)
    # bf16 MXU operands with f32 accumulation -> modest tolerance vs f32 ref.
    max_err = float(jnp.max(jnp.abs(out - ref)))
    assert jnp.allclose(out, ref, atol=5e-3, rtol=5e-2), max_err
    print("KERNEL_OK")
</pallas_src>

<mosaic_0001>
module attributes {stable_mosaic.version = 11 : i64} {
  func.func @probe_kernel(%arg0: i32, %arg1: i32, %arg2: memref<1x32x16xbf16, #tpu.memory_space<vmem>>, %arg3: memref<8x32xbf16, #tpu.memory_space<vmem>>, %arg4: memref<8x1xf32, #tpu.memory_space<vmem>>, %arg5: memref<16x4xbf16, #tpu.memory_space<vmem>>, %arg6: memref<4x16xbf16, #tpu.memory_space<vmem>>, %arg7: memref<1x8x16x16xf32, #tpu.memory_space<vmem>>, %arg8: memref<8x4x4xbf16, #tpu.memory_space<vmem>>) attributes {dimension_semantics = [#tpu.dimension_semantics<parallel>, #tpu.dimension_semantics<arbitrary>], iteration_bounds = array<i64: 2, 1>, scalar_prefetch = 0 : i64, scratch_operands = 1 : i64, tpu.core_type = #tpu.core_type<tc>, window_params = [{transform_indices = @transform_0, window_bounds = array<i64: 1, 32, 16>}, {pipeline_mode = #tpu.pipeline_mode<synchronous>, transform_indices = @transform_1, window_bounds = array<i64: 8, 32>}, {pipeline_mode = #tpu.pipeline_mode<synchronous>, transform_indices = @transform_2, window_bounds = array<i64: 8, 1>}, {transform_indices = @transform_3, window_bounds = array<i64: 16, 4>}, {pipeline_mode = #tpu.pipeline_mode<synchronous>, transform_indices = @transform_4, window_bounds = array<i64: 4, 16>}, {transform_indices = @transform_5, window_bounds = array<i64: 1, 8, 16, 16>}]} {
    %c0_i32 = arith.constant 0 : i32
    %0 = arith.cmpi eq, %arg1, %c0_i32 : i32
    %1 = arith.extui %0 : i1 to i32
    %c0_i32_0 = arith.constant 0 : i32
    %2 = arith.cmpi ne, %1, %c0_i32_0 : i32
    scf.if %2 {
      %c0_12 = arith.constant 0 : index
      %c0_13 = arith.constant 0 : index
      %16 = vector.load %arg3[%c0_12, %c0_13] : memref<8x32xbf16, #tpu.memory_space<vmem>>, vector<8x32xbf16>
      %c0_14 = arith.constant 0 : index
      %c0_15 = arith.constant 0 : index
      %c0_16 = arith.constant 0 : index
      %17 = vector.load %arg2[%c0_14, %c0_15, %c0_16] : memref<1x32x16xbf16, #tpu.memory_space<vmem>>, vector<1x32x16xbf16>
      %18 = vector.shape_cast %17 : vector<1x32x16xbf16> to vector<32x16xbf16>
      %cst_17 = arith.constant dense<0.000000e+00> : vector<8x16xf32>
      %19 = tpu.matmul %16, %18, %cst_17 {dimension_numbers = #tpu.dot_dimension_numbers<[1], [0], [0], [1], [0, 0, 1, 1], [], []>} : vector<8x32xbf16>, vector<32x16xbf16>, vector<8x16xf32> -> vector<8x16xf32>
      %c0_18 = arith.constant 0 : index
      %c0_19 = arith.constant 0 : index
      %20 = vector.load %arg4[%c0_18, %c0_19] : memref<8x1xf32, #tpu.memory_space<vmem>>, vector<8x1xf32>
      %21 = vector.broadcast %20 : vector<8x1xf32> to vector<8x16xf32>
      %22 = arith.addf %19, %21 : vector<8x16xf32>
      %23 = vector.shape_cast %22 : vector<8x16xf32> to vector<8x4x4xf32>
      %24 = arith.truncf %23 : vector<8x4x4xf32> to vector<8x4x4xbf16>
      %c0_20 = arith.constant 0 : index
      %c0_21 = arith.constant 0 : index
      %c0_22 = arith.constant 0 : index
      %25 = vector.load %arg8[%c0_20, %c0_21, %c0_22] : memref<8x4x4xbf16, #tpu.memory_space<vmem>>, vector<8x4x4xbf16>
      tpu.vector_store %arg8[%c0_20, %c0_21, %c0_22], %24 {strides = array<i32>} : memref<8x4x4xbf16, #tpu.memory_space<vmem>>, vector<8x4x4xbf16>,
    } else {
    }
    %c0 = arith.constant 0 : index
    %c0_1 = arith.constant 0 : index
    %3 = vector.load %arg5[%c0, %c0_1] : memref<16x4xbf16, #tpu.memory_space<vmem>>, vector<16x4xbf16>
    %4 = vector.shape_cast %3 : vector<16x4xbf16> to vector<1x16x4xbf16>
    %5 = vector.broadcast %4 : vector<1x16x4xbf16> to vector<8x16x4xbf16>
    %c0_2 = arith.constant 0 : index
    %c0_3 = arith.constant 0 : index
    %c0_4 = arith.constant 0 : index
    %6 = vector.load %arg8[%c0_2, %c0_3, %c0_4] : memref<8x4x4xbf16, #tpu.memory_space<vmem>>, vector<8x4x4xbf16>
    "tpu.trace_start"() <{level = 10 : i32, message = "nhi,nij->nhj"}> : () -> ()
    %cst = arith.constant dense<0.000000e+00> : vector<8x16x4xf32>
    %7 = tpu.matmul %5, %6, %cst {dimension_numbers = #tpu.dot_dimension_numbers<[2], [1], [1], [2], [0, 0, 0, 1, 1, 2], [0], [0]>} : vector<8x16x4xbf16>, vector<8x4x4xbf16>, vector<8x16x4xf32> -> vector<8x16x4xf32>
    "tpu.trace_stop"() : () -> ()
    %8 = vector.shape_cast %7 : vector<8x16x4xf32> to vector<128x4xf32>
    %9 = arith.truncf %8 : vector<128x4xf32> to vector<128x4xbf16>
    %c0_5 = arith.constant 0 : index
    %c0_6 = arith.constant 0 : index
    %10 = vector.load %arg6[%c0_5, %c0_6] : memref<4x16xbf16, #tpu.memory_space<vmem>>, vector<4x16xbf16>
    %cst_7 = arith.constant dense<0.000000e+00> : vector<128x16xf32>
    %11 = tpu.matmul %9, %10, %cst_7 {dimension_numbers = #tpu.dot_dimension_numbers<[1], [0], [0], [1], [0, 0, 1, 1], [], []>} : vector<128x4xbf16>, vector<4x16xbf16>, vector<128x16xf32> -> vector<128x16xf32>
    %12 = vector.shape_cast %11 : vector<128x16xf32> to vector<8x16x16xf32>
    %c0_8 = arith.constant 0 : index
    %c0_9 = arith.constant 0 : index
    %c0_10 = arith.constant 0 : index
    %c0_11 = arith.constant 0 : index
    %13 = vector.load %arg7[%c0_8, %c0_9, %c0_10, %c0_11] : memref<1x8x16x16xf32, #tpu.memory_space<vmem>>, vector<1x8x16x16xf32>
    %14 = vector.shape_cast %13 : vector<1x8x16x16xf32> to vector<8x16x16xf32>
    %15 = vector.shape_cast %12 : vector<8x16x16xf32> to vector<1x8x16x16xf32>
    tpu.vector_store %arg7[%c0_8, %c0_9, %c0_10, %c0_11], %15 {strides = array<i32>} : memref<1x8x16x16xf32, #tpu.memory_space<vmem>>, vector<1x8x16x16xf32>,
    return
  }
  func.func @transform_0(%arg0: i32, %arg1: i32) -> (i32, i32, i32) {
    %c0_i32 = arith.constant 0 : i32
    %c0_i32_0 = arith.constant 0 : i32
    %c0_i32_1 = arith.constant 0 : i32
    return %arg0, %c0_i32, %c0_i32_0 : i32, i32, i32
  }
  func.func @transform_1(%arg0: i32, %arg1: i32) -> (i32, i32) {
    %c0_i32 = arith.constant 0 : i32
    %c0_i32_0 = arith.constant 0 : i32
    %c0_i32_1 = arith.constant 0 : i32
    return %c0_i32, %c0_i32_0 : i32, i32
  }
  func.func @transform_2(%arg0: i32, %arg1: i32) -> (i32, i32) {
    %c0_i32 = arith.constant 0 : i32
    %c0_i32_0 = arith.constant 0 : i32
    %c0_i32_1 = arith.constant 0 : i32
    return %c0_i32, %c0_i32_0 : i32, i32
  }
  func.func @transform_3(%arg0: i32, %arg1: i32) -> (i32, i32) {
    %c0_i32 = arith.constant 0 : i32
    %c0_i32_0 = arith.constant 0 : i32
    return %arg1, %c0_i32 : i32, i32
  }
  func.func @transform_4(%arg0: i32, %arg1: i32) -> (i32, i32) {
    %c0_i32 = arith.constant 0 : i32
    %c0_i32_0 = arith.constant 0 : i32
    %c0_i32_1 = arith.constant 0 : i32
    return %c0_i32, %c0_i32_0 : i32, i32
  }
  func.func @transform_5(%arg0: i32, %arg1: i32) -> (i32, i32, i32, i32) {
    %c0_i32 = arith.constant 0 : i32
    %c0_i32_0 = arith.constant 0 : i32
    %c0_i32_1 = arith.constant 0 : i32
    return %arg0, %c0_i32, %arg1, %c0_i32_0 : i32, i32, i32, i32
  }
}

</mosaic_0001>

<llo_original>
// kernel: tpu_custom_call.1
$region0: #{tpu_custom_call.1}
  #allocation0 [shape = 'u32[]', space=smem, size = 0x4, offset = 0x4, fixed_abs, tag = 'smem constant byte address 0x4 - core index']
  #allocation1 [shape = 'u32[144,128]{1,0:T(1,128)}', space=vmem, size = 0x12000, scoped, tag = 'internal scratch']
  #allocation2 [shape = 'bf16[8,4,4]{2,1,0:T(4,128)(2,1)}', space=vmem, size = 0x2000, scoped, tag = 'scratch operand']
  %s0 = inlined_call_operand.vmem [shape: bf16[2,32,16], index: 0, kind: input, shape index: {}]
  %s1 = inlined_call_operand.vmem [shape: bf16[8,32], index: 1, kind: input, shape index: {}]
  %s2 = inlined_call_operand.vmem [shape: f32[8,1], index: 2, kind: input, shape index: {}]
  %s3 = inlined_call_operand.vmem [shape: bf16[16,4], index: 3, kind: input, shape index: {}]
  %s4 = inlined_call_operand.vmem [shape: bf16[4,16], index: 4, kind: input, shape index: {}]
  %s5 = inlined_call_operand.hbm [shape: f32[2,8,16,16], index: 5, kind: output, shape index: {}]
  %s6 = sld [smem:[#allocation0]]
  $region57: #{tpu_custom_call.1} parent=0
    _
  %s8 = ssub.s32 1, %s6
  %s9 = scalar_select 0, %s8, %s6
  $region1: #{tpu_custom_call.1} parent=0
    #allocation3 [shape = 'u8[131072]{0}', space=vmem, size = 0x20000, scoped, tag = 'output window, operand 0']
    #allocation4 [shape = 's32[2]{0}', space=sflag, size = 0x8, scoped, tag = 'scoped memory for tpu_custom_call.1']
    %10 = vsyncpa [#allocation4], 0
    %s11 = scalar_lea.sflag [#allocation4], 1
    %12 = vsyncpa %s11, 0
    loop: start=0, step=1, limit=4
    $region2: #{tpu_custom_call.1} parent=1 // loop_pre_header
      _
    $region3: #{tpu_custom_call.1} parent=1 // loop_header
      %s14 = sphi 0, %s18
      %p15 = scmp.ge.s32.totalorder %s14, 4
      %s21 = sphi 0, %s33
      %s22 = sphi 0, %s29
      %s23 = sphi 0, %s21
      %s24 = sphi 0, %s22
      %s25 = sphi 0, %s23
      %s26 = sphi 0, %s24
      %s36 = sphi 0, %s38
      %s39 = sphi 0, %s36
      %s40 = sphi 0, %s39
      %s56 = sphi 0, %s40
      %s60 = sphi 0, %s60
      %s62 = sphi 0, %s60
      %s63 = sphi 0, %s62
      %s77 = sphi 0, %s63
      %s81 = sphi 0, %s81
      %s83 = sphi 0, %s81
      %s84 = sphi 0, %s83
      %s98 = sphi 0, %s84
      %s104 = sphi 0, %s106
      %s107 = sphi 0, %s104
      %s108 = sphi 0, %s107
      %s124 = sphi 0, %s108
      %s128 = sphi 0, %s128
      %s130 = sphi 0, %s128
      %s131 = sphi 0, %s130
      %s145 = sphi 0, %s131
      %s153 = sphi 0, %s155
      %s156 = sphi 0, %s153
      %s157 = sphi 0, %s156
      %s173 = sphi 0, %s157
    $region4: #{tpu_custom_call.1} parent=1 // loop_header_branch
      %17 = sbr.rel (%p15) target = $region8
    $region5: #{tpu_custom_call.1} parent=1 // loop_body
      %s19 = ssub.s32 %s14, 1
      %s20 = ssub.s32 %s14, 2
      %s27 = sadd.s32 1, %s22
      %p28 = scmp.ge.s32.totalorder %s27, 1
      %s29 = scalar_select %p28, 0, %s27
      %s30 = sadd.s32 1, %s21
      %s31 = scalar_select %p28, %s30, %s21
      %p32 = scmp.ge.s32.totalorder %s31, 2
      %s33 = scalar_select %p32, 0, %s31
      %s34 = ssub.s32 %s21, %s33
      %p35 = scmp.eq.s32.totalorder %s34, 0
      %s37 = sadd.s32 %s36, 1
      %s38 = scalar_select %p35, %s36, %s37
      %p41 = pneg %p35
      %p42 = scmp.eq.s32.totalorder %s14, 1
      %p43 = por %p41, %p42
      %p44 = scmp.ne.s32.totalorder %s36, %s39
      %p45 = scmp.eq.s32.totalorder %s14, 0
      %p46 = por %p44, %p45
      %p47 = scmp.ne.s32.totalorder %s36, %s39
      %p48 = scmp.eq.s32.totalorder %s19, 1
      %p49 = por %p47, %p48
      %p50 = scmp.ne.s32.totalorder %s39, %s40
      %p51 = scmp.eq.s32.totalorder %s19, 0
      %p52 = por %p50, %p51
      %p53 = scmp.ne.s32.totalorder %s39, %s40
      %p54 = scmp.eq.s32.totalorder %s20, 1
      %p55 = por %p53, %p54
      %p57 = scmp.ne.s32.totalorder %s40, %s56
      %p58 = scmp.eq.s32.totalorder %s20, 0
      %p59 = por %p57, %p58
      %s61 = sadd.s32 %s60, 1
      %p64 = scmp.eq.s32.totalorder %s14, 1
      %p65 = scmp.ne.s32.totalorder %s60, %s62
      %p66 = scmp.eq.s32.totalorder %s14, 0
      %p67 = por %p65, %p66
      %p68 = scmp.ne.s32.totalorder %s60, %s62
      %p69 = scmp.eq.s32.totalorder %s19, 1
      %p70 = por %p68, %p69
      %p71 = scmp.ne.s32.totalorder %s62, %s63
      %p72 = scmp.eq.s32.totalorder %s19, 0
      %p73 = por %p71, %p72
      %p74 = scmp.ne.s32.totalorder %s62, %s63
      %p75 = scmp.eq.s32.totalorder %s20, 1
      %p76 = por %p74, %p75
      %p78 = scmp.ne.s32.totalorder %s63, %s77
      %p79 = scmp.eq.s32.totalorder %s20, 0
      %p80 = por %p78, %p79
      %s82 = sadd.s32 %s81, 1
      %p85 = scmp.eq.s32.totalorder %s14, 1
      %p86 = scmp.ne.s32.totalorder %s81, %s83
      %p87 = scmp.eq.s32.totalorder %s14, 0
      %p88 = por %p86, %p87
      %p89 = scmp.ne.s32.totalorder %s81, %s83
      %p90 = scmp.eq.s32.totalorder %s19, 1
      %p91 = por %p89, %p90
      %p92 = scmp.ne.s32.totalorder %s83, %s84
      %p93 = scmp.eq.s32.totalorder %s19, 0
      %p94 = por %p92, %p93
      %p95 = scmp.ne.s32.totalorder %s83, %s84
      %p96 = scmp.eq.s32.totalorder %s20, 1
      %p97 = por %p95, %p96
      %p99 = scmp.ne.s32.totalorder %s84, %s98
      %p100 = scmp.eq.s32.totalorder %s20, 0
      %p101 = por %p99, %p100
      %s102 = ssub.s32 %s22, %s29
      %p103 = scmp.eq.s32.totalorder %s102, 0
      %s105 = sadd.s32 %s104, 1
      %s106 = scalar_select %p103, %s104, %s105
      %p109 = pneg %p103
      %p110 = scmp.eq.s32.totalorder %s14, 1
      %p111 = por %p109, %p110
      %p112 = scmp.ne.s32.totalorder %s104, %s107
      %p113 = scmp.eq.s32.totalorder %s14, 0
      %p114 = por %p112, %p113
      %p115 = scmp.ne.s32.totalorder %s104, %s107
      %p116 = scmp.eq.s32.totalorder %s19, 1
      %p117 = por %p115, %p116
      %p118 = scmp.ne.s32.totalorder %s107, %s108
      %p119 = scmp.eq.s32.totalorder %s19, 0
      %p120 = por %p118, %p119
      %p121 = scmp.ne.s32.totalorder %s107, %s108
      %p122 = scmp.eq.s32.totalorder %s20, 1
      %p123 = por %p121, %p122
      %p125 = scmp.ne.s32.totalorder %s108, %s124
      %p126 = scmp.eq.s32.totalorder %s20, 0
      %p127 = por %p125, %p126
      %s129 = sadd.s32 %s128, 1
      %p132 = scmp.eq.s32.totalorder %s14, 1
      %p133 = scmp.ne.s32.totalorder %s128, %s130
      %p134 = scmp.eq.s32.totalorder %s14, 0
      %p135 = por %p133, %p134
      %p136 = scmp.ne.s32.totalorder %s128, %s130
      %p137 = scmp.eq.s32.totalorder %s19, 1
      %p138 = por %p136, %p137
      %p139 = scmp.ne.s32.totalorder %s130, %s131
      %p140 = scmp.eq.s32.totalorder %s19, 0
      %p141 = por %p139, %p140
      %p142 = scmp.ne.s32.totalorder %s130, %s131
      %p143 = scmp.eq.s32.totalorder %s20, 1
      %p144 = por %p142, %p143
      %p146 = scmp.ne.s32.totalorder %s131, %s145
      %p147 = scmp.eq.s32.totalorder %s20, 0
      %p148 = por %p146, %p147
      %s149 = ssub.s32 %s21, %s33
      %s150 = ssub.s32 %s22, %s29
      %s151 = sor.u32 %s149, %s150
      %p152 = scmp.eq.s32.totalorder %s151, 0
      %s154 = sadd.s32 %s153, 1
      %s155 = scalar_select %p152, %s153, %s154
      %p158 = pneg %p152
      %p159 = scmp.eq.s32.totalorder %s14, 1
      %p160 = por %p158, %p159
      %p161 = scmp.ne.s32.totalorder %s153, %s156
      %p162 = scmp.eq.s32.totalorder %s14, 0
      %p163 = por %p161, %p162
      %p164 = scmp.ne.s32.totalorder %s153, %s156
      %p165 = scmp.eq.s32.totalorder %s19, 1
      %p166 = por %p164, %p165
      %p167 = scmp.ne.s32.totalorder %s156, %s157
      %p168 = scmp.eq.s32.totalorder %s19, 0
      %p169 = por %p167, %p168
      %p170 = scmp.ne.s32.totalorder %s156, %s157
      %p171 = scmp.eq.s32.totalorder %s20, 1
      %p172 = por %p170, %p171
      %p174 = scmp.ne.s32.totalorder %s157, %s173
      %p175 = scmp.eq.s32.totalorder %s20, 0
      %p176 = por %p174, %p175
      %p177 = scmp.le.s32.totalorder 1, %s14
      %p178 = scmp.lt.s32.totalorder %s14, 3
      %p179 = pnand %p177, %p178
      %p180 = pneg %p179
      // Predicated region
      $region9: #{tpu_custom_call.1} parent=5 // pred_check
        _
      $region10: #{tpu_custom_call.1} parent=5 // pred_check_branch
        %182 = sbr.rel (%p179) target = $region12
      $region11: #{tpu_custom_call.1} parent=5 // pred_region
        %s183 = ssub.s32 %s14, 1
        // Predicated region
        $region13: #{tpu_custom_call.1} parent=11 // pred_check
          %p184 = pneg %p73
        $region14: #{tpu_custom_call.1} parent=11 // pred_check_branch
          %186 = sbr.rel (%p184) target = $region16
        $region15: #{tpu_custom_call.1} parent=11 // pred_region
          _
        $region16: #{tpu_custom_call.1} parent=11 // pred_fallthru
          _
        // Predicated region
        $region17: #{tpu_custom_call.1} parent=11 // pred_check
          %p187 = pneg %p94
        $region18: #{tpu_custom_call.1} parent=11 // pred_check_branch
          %189 = sbr.rel (%p187) target = $region20
        $region19: #{tpu_custom_call.1} parent=11 // pred_region
          _
        $region20: #{tpu_custom_call.1} parent=11 // pred_fallthru
          _
        // Predicated region
        $region21: #{tpu_custom_call.1} parent=11 // pred_check
          %p190 = pneg %p120
        $region22: #{tpu_custom_call.1} parent=11 // pred_check_branch
          %192 = sbr.rel (%p190) target = $region24
        $region23: #{tpu_custom_call.1} parent=11 // pred_region
          %s193 = smul.u32 2, %s24
          %p194 = scmp.lt.s32.totalorder %s193, 1
          %s195 = scalar_select %p194, %s193, 1
          %s196 = smul.addr %s195, 4
          %s197 = scalar_lea.vmem %s3, %s196
          %s198 = smul.u32 2, %s24
        $region24: #{tpu_custom_call.1} parent=11 // pred_fallthru
          _
        // Predicated region
        $region25: #{tpu_custom_call.1} parent=11 // pred_check
          %p199 = pneg %p141
        $region26: #{tpu_custom_call.1} parent=11 // pred_check_branch
          %201 = sbr.rel (%p199) target = $region28
        $region27: #{tpu_custom_call.1} parent=11 // pred_region
          _
        $region28: #{tpu_custom_call.1} parent=11 // pred_fallthru
          _
      $region12: #{tpu_custom_call.1} parent=5 // pred_fallthru
        _
      %p202 = scmp.lt.s32.totalorder %s14, 2
      // Predicated region
      $region29: #{tpu_custom_call.1} parent=5 // pred_check
        %p203 = pneg %p202
      $region30: #{tpu_custom_call.1} parent=5 // pred_check_branch
        %205 = sbr.rel (%p203) target = $region32
      $region31: #{tpu_custom_call.1} parent=5 // pred_region
        // Predicated region
        $region33: #{tpu_custom_call.1} parent=31 // pred_check
          %p206 = pneg %p46
        $region34: #{tpu_custom_call.1} parent=31 // pred_check_branch
          %208 = sbr.rel (%p206) target = $region36
        $region35: #{tpu_custom_call.1} parent=31 // pred_region
          %p209 = scmp.lt.s32.totalorder %s21, 1
          %s210 = scalar_select %p209, %s21, 1
          %s211 = smul.addr %s210, 4
          %s212 = smul.addr %s211, 4
          %s213 = scalar_lea.vmem %s0, %s212
        $region36: #{tpu_custom_call.1} parent=31 // pred_fallthru
          _
      $region32: #{tpu_custom_call.1} parent=5 // pred_fallthru
        _
      %p214 = scmp.le.s32.totalorder 1, %s14
      %p215 = scmp.lt.s32.totalorder %s14, 3
      %p216 = pnand %p214, %p215
      %p217 = pneg %p216
      // Predicated region
      $region37: #{tpu_custom_call.1} parent=5 // pred_check
        _
      $region38: #{tpu_custom_call.1} parent=5 // pred_check_branch
        %219 = sbr.rel (%p216) target = $region40
      $region39: #{tpu_custom_call.1} parent=5 // pred_region
        %s220 = ssub.s32 %s14, 1
        %p221 = scmp.lt.s32.totalorder %s23, 1
        %s222 = scalar_select %p221, %s23, 1
        %s223 = smul.addr %s222, 4
        %s224 = smul.addr %s223, 4
        %s225 = scalar_lea.vmem %s0, %s224
        %p226 = pneg %p52
        %p227 = pneg %p49
        %p228 = pneg %p73
        %p229 = pneg %p70
        %p230 = pneg %p94
        %p231 = pneg %p91
        %s232 = smul.u32 2, %s24
        %p233 = scmp.lt.s32.totalorder %s232, 1
        %s234 = scalar_select %p233, %s232, 1
        %s235 = smul.addr %s234, 4
        %s236 = scalar_lea.vmem %s3, %s235
        %p237 = pneg %p120
        %p238 = pneg %p117
        %p239 = pneg %p141
        %p240 = pneg %p138
        %p241 = pneg %p169
        %p242 = pneg %p166
        %s243 = sand.u32 %s156, 1
        %s244 = scalar_lea.sflag [#allocation4], %s243
        %s245 = sand.u32 %s156, 1
        %s246 = smul.addr %s245, 128
        %s247 = scalar_lea.vmem [#allocation3], %s246
        %p248 = scmp.lt.s32.totalorder %s23, 1
        %s249 = scalar_select %p248, %s23, 1
        %s250 = smul.addr %s249, 4
        %s251 = smul.addr %s250, 4
        %s252 = scalar_lea.vmem %s0, %s251
        %s253 = smul.u32 2, %s24
        %p254 = scmp.lt.s32.totalorder %s253, 1
        %s255 = scalar_select %p254, %s253, 1
        %s256 = smul.addr %s255, 4
        %s257 = scalar_lea.vmem %s3, %s256
        %s258 = smul.u32 2, %s24
        %s259 = smul.u32 2, %s24
        %p261 = scmp.eq.s32.totalorder %s24, 0
        // Predicated region
        $region41: #{tpu_custom_call.1} parent=39 // pred_check
          %p262 = pneg %p261
        $region42: #{tpu_custom_call.1} parent=39 // pred_check_branch
          %264 = sbr.rel (%p262) target = $region44
        $region43: #{tpu_custom_call.1} parent=39 // pred_region
          %v265 = vld [vmem:[%s1] sm:$0xf]
          %v266 = vld [vmem:[%s252] sm:$0xf]
          %v267 = vld [vmem:[%s252 + $0x4] sm:$0xf]
          %v268 = vld [vmem:[%s252 + $0x8] sm:$0xf]
          %v269 = vld [vmem:[%s252 + $0xc] sm:$0xf]
          %v270 = vld [vmem:[%s2] sm:$0xff]
          %272 = vset.pattern.permute.xlu0 0
          %273 = vperm.xlu0 %272, %v270
          %v274 = vpop.permute.xlu0 %273
          %v280 = vunpack.c.l.b16 %v266
          %v281 = vunpack.c.l.b16 %v267
          %v282 = vunpack.c.l.b16 %v268
          %v283 = vunpack.c.l.b16 %v269
          %v284 = vpack.c.b16 %v281, %v280
          %v285 = vpack.c.b16 %v283, %v282
          %vm288 = vcmask 261120
          %v290 = vsel %vm288, %v265, 0
          %292 = vmatprep.subr.bf16.mxu0 0
          %293 = vmatpush1.bf16.msra.mxu0 %v284
          %294 = vmatprep.subr.bf16.mxu0 0
          %295 = vmatpush1.bf16.msra.mxu0 %v285
          %296 = vmatprep.subr.bf16.mxu0 0
          %297 = vmatpush1.bf16.msra.mxu0 0
          %298 = vmatprep.subr.bf16.mxu0 0
          %299 = vmatpush1.bf16.msra.mxu0 0
          %300 = vmatprep.subr.bf16.mxu0 0
          %301 = vmatpush1.bf16.msra.mxu0 0
          %302 = vmatprep.subr.bf16.mxu0 0
          %303 = vmatpush1.bf16.msra.mxu0 0
          %304 = vmatprep.subr.bf16.mxu0 0
          %305 = vmatpush1.bf16.msra.mxu0 0
          %306 = vmatprep.subr.bf16.mxu0 0
          %307 = vmatpush1.bf16.msra.mxu0 0
          %308 = vmatprep.subr.bf16.mxu0 0
          %309 = vmatpush1.bf16.msra.mxu0 0
          %310 = vmatprep.subr.bf16.mxu0 0
          %311 = vmatpush1.bf16.msra.mxu0 0
          %312 = vmatprep.subr.bf16.mxu0 0
          %313 = vmatpush1.bf16.msra.mxu0 0
          %314 = vmatprep.subr.bf16.mxu0 0
          %315 = vmatpush1.bf16.msra.mxu0 0
          %316 = vmatprep.subr.bf16.mxu0 0
          %317 = vmatpush1.bf16.msra.mxu0 0
          %318 = vmatprep.subr.bf16.mxu0 0
          %319 = vmatpush1.bf16.msra.mxu0 0
          %320 = vmatprep.subr.bf16.mxu0 0
          %321 = vmatpush1.bf16.msra.mxu0 0
          %322 = vmatprep.subr.bf16.mxu0 0
          %323 = vmatpush1.bf16.msra.mxu0 0
          %324 = vmatprep.mubr.bf16.mxu0 0
          %325 = vmatmul.mubr.bf16.gmra.mrb[0].mxu0 %v290
          %v326 = vpop.f32.mrb[0].mxu0
          %v327 = vadd.f32 %v274, %v326
          %v328 = vpop.f32.mrb[0].mxu0
          %v329 = vpop.f32.mrb[0].mxu0
          %v330 = vpop.f32.mrb[0].mxu0
          %331 = vdwg.mxu0
          %333 = vrot.lane.b32.xlu0 %v327, 124
          %v334 = vpop.permute.xlu0 %333
          %336 = vrot.lane.b32.xlu0 %v327, 120
          %v337 = vpop.permute.xlu0 %336
          %339 = vrot.lane.b32.xlu0 %v327, 116
          %v340 = vpop.permute.xlu0 %339
          %v342 = vcombine.low %v327, %v337
          %v343 = vcombine.high %v327, %v337
          %v345 = vunpack.c.l.s4 1983009808
          %v346 = vunpack.c.0.s8 %v345
          %v347 = vlaneseq
          %v348 = vshrl.u32 %v347, 7
          %v349 = vsub.s32 %v346, %v348
          %v350 = vrot.slane %v342, %v349
          %v352 = vunpack.c.l.s4 1983009808
          %v353 = vunpack.c.0.s8 %v352
          %v354 = vlaneseq
          %v355 = vshrl.u32 %v354, 7
          %v356 = vsub.s32 %v353, %v355
          %v357 = vrot.slane %v343, %v356
          %v358 = vcombine.low %v334, %v340
          %v359 = vcombine.high %v334, %v340
          %v361 = vunpack.c.l.s4 1983009808
          %v362 = vunpack.c.0.s8 %v361
          %v363 = vlaneseq
          %v364 = vshrl.u32 %v363, 7
          %v365 = vsub.s32 %v362, %v364
          %v366 = vrot.slane %v358, %v365
          %v368 = vunpack.c.l.s4 1983009808
          %v369 = vunpack.c.0.s8 %v368
          %v370 = vlaneseq
          %v371 = vshrl.u32 %v370, 7
          %v372 = vsub.s32 %v369, %v371
          %v373 = vrot.slane %v359, %v372
          %v374 = vcombine.low %v350, %v366
          %v375 = vcombine.high %v350, %v366
          %v377 = vunpack.c.l.s4 1934713408
          %v378 = vunpack.c.0.s8 %v377
          %v379 = vlaneseq
          %v380 = vshrl.u32 %v379, 7
          %v381 = vsub.s32 %v378, %v380
          %v382 = vrot.slane %v374, %v381
          %v384 = vunpack.c.l.s4 1934713408
          %v385 = vunpack.c.0.s8 %v384
          %v386 = vlaneseq
          %v387 = vshrl.u32 %v386, 7
          %v388 = vsub.s32 %v385, %v387
          %v389 = vrot.slane %v375, %v388
          %v390 = vcombine.low %v357, %v373
          %v391 = vcombine.high %v357, %v373
          %v393 = vunpack.c.l.s4 1934713408
          %v394 = vunpack.c.0.s8 %v393
          %v395 = vlaneseq
          %v396 = vshrl.u32 %v395, 7
          %v397 = vsub.s32 %v394, %v396
          %v398 = vrot.slane %v390, %v397
          %v400 = vunpack.c.l.s4 1934713408
          %v401 = vunpack.c.0.s8 %v400
          %v402 = vlaneseq
          %v403 = vshrl.u32 %v402, 7
          %v404 = vsub.s32 %v401, %v403
          %v405 = vrot.slane %v391, %v404
          %v406 = vcombine.high %v382, 0.0
          %v407 = vcombine.high %v389, 0.0
          %v408 = vcombine.high %v398, 0.0
          %v409 = vcombine.high %v405, 0.0
          %v410 = vpack.c.bf16 %v382, %v382
          %v411 = vpack.c.bf16 %v406, %v406
          %v412 = vpack.c.bf16 %v389, %v389
          %v413 = vpack.c.bf16 %v407, %v407
          %v414 = vpack.c.bf16 %v398, %v398
          %v415 = vpack.c.bf16 %v408, %v408
          %v416 = vpack.c.bf16 %v405, %v405
          %v417 = vpack.c.bf16 %v409, %v409
          %vm418 = vcmask 25600
          %419 = vst.msk [vmem:[#allocation2] sm:$0x3] %vm418, %v410
          %420 = vst.msk [vmem:[#allocation2 + $0x2] sm:$0x3] %vm418, %v411
          %421 = vst.msk [vmem:[#allocation2 + $0x4] sm:$0x3] %vm418, %v412
          %422 = vst.msk [vmem:[#allocation2 + $0x6] sm:$0x3] %vm418, %v413
          %423 = vst.msk [vmem:[#allocation2 + $0x8] sm:$0x3] %vm418, %v414
          %424 = vst.msk [vmem:[#allocation2 + $0xa] sm:$0x3] %vm418, %v415
          %425 = vst.msk [vmem:[#allocation2 + $0xc] sm:$0x3] %vm418, %v416
          %426 = vst.msk [vmem:[#allocation2 + $0xe] sm:$0x3] %vm418, %v417
        $region44: #{tpu_custom_call.1} parent=39 // pred_fallthru
          _
        %v427 = vld [vmem:[%s257] sm:$0xf]
        %v428 = vld [vmem:[%s257 + $0x4] sm:$0xf]
        %v429 = vld [vmem:[#allocation2] sm:$0x3]
        %v430 = vld [vmem:[#allocation2 + $0x2] sm:$0x3]
        %v431 = vld [vmem:[#allocation2 + $0x4] sm:$0x3]
        %v432 = vld [vmem:[#allocation2 + $0x6] sm:$0x3]
        %v433 = vld [vmem:[#allocation2 + $0x8] sm:$0x3]
        %v434 = vld [vmem:[#allocation2 + $0xa] sm:$0x3]
        %v435 = vld [vmem:[#allocation2 + $0xc] sm:$0x3]
        %v436 = vld [vmem:[#allocation2 + $0xe] sm:$0x3]
        %v439 = vunpack.c.l.b16 %v427
        %v440 = vunpack.c.l.b16 %v428
        %v441 = vpack.c.b16 %v440, %v439
        %vm442 = vcmask 31744
        %v444 = vsel %vm442, %v441, 0
        %vm446 = vcmask 1041408
        %v448 = vsel %vm446, %v429, 0
        %450 = vmatprep.subr.bf16.mxu0 0
        %451 = vmatpush1.bf16.msra.mxu0 %v448
        %452 = vmatprep.subr.bf16.mxu0 0
        %453 = vmatpush1.bf16.msra.mxu0 0
        %454 = vmatprep.subr.bf16.mxu0 0
        %455 = vmatpush1.bf16.msra.mxu0 0
        %456 = vmatprep.subr.bf16.mxu0 0
        %457 = vmatpush1.bf16.msra.mxu0 0
        %458 = vmatprep.subr.bf16.mxu0 0
        %459 = vmatpush1.bf16.msra.mxu0 0
        %460 = vmatprep.subr.bf16.mxu0 0
        %461 = vmatpush1.bf16.msra.mxu0 0
        %462 = vmatprep.subr.bf16.mxu0 0
        %463 = vmatpush1.bf16.msra.mxu0 0
        %464 = vmatprep.subr.bf16.mxu0 0
        %465 = vmatpush1.bf16.msra.mxu0 0
        %466 = vmatprep.subr.bf16.mxu0 0
        %467 = vmatpush1.bf16.msra.mxu0 0
        %468 = vmatprep.subr.bf16.mxu0 0
        %469 = vmatpush1.bf16.msra.mxu0 0
        %470 = vmatprep.subr.bf16.mxu0 0
        %471 = vmatpush1.bf16.msra.mxu0 0
        %472 = vmatprep.subr.bf16.mxu0 0
        %473 = vmatpush1.bf16.msra.mxu0 0
        %474 = vmatprep.subr.bf16.mxu0 0
        %475 = vmatpush1.bf16.msra.mxu0 0
        %476 = vmatprep.subr.bf16.mxu0 0
        %477 = vmatpush1.bf16.msra.mxu0 0
        %478 = vmatprep.subr.bf16.mxu0 0
        %479 = vmatpush1.bf16.msra.mxu0 0
        %480 = vmatprep.subr.bf16.mxu0 0
        %481 = vmatpush1.bf16.msra.mxu0 0
        %482 = vmatprep.mubr.bf16.mxu0 0
        %483 = vmatmul.mubr.bf16.gmra.mrb[0].mxu0 %v444
        %v484 = vpop.f32.mrb[0].mxu0
        %v485 = vadd.f32 0.0, %v484
        %v486 = vpop.f32.mrb[0].mxu0
        %v487 = vpop.f32.mrb[0].mxu0
        %v488 = vadd.f32 0.0, %v487
        %v489 = vpop.f32.mrb[0].mxu0
        %490 = vdwg.mxu0
        %v492 = vsel %vm446, %v430, 0
        %494 = vmatprep.subr.bf16.mxu0 0
        %495 = vmatpush1.bf16.msra.mxu0 %v492
        %496 = vmatprep.subr.bf16.mxu0 0
        %497 = vmatpush1.bf16.msra.mxu0 0
        %498 = vmatprep.subr.bf16.mxu0 0
        %499 = vmatpush1.bf16.msra.mxu0 0
        %500 = vmatprep.subr.bf16.mxu0 0
        %501 = vmatpush1.bf16.msra.mxu0 0
        %502 = vmatprep.subr.bf16.mxu0 0
        %503 = vmatpush1.bf16.msra.mxu0 0
        %504 = vmatprep.subr.bf16.mxu0 0
        %505 = vmatpush1.bf16.msra.mxu0 0
        %506 = vmatprep.subr.bf16.mxu0 0
        %507 = vmatpush1.bf16.msra.mxu0 0
        %508 = vmatprep.subr.bf16.mxu0 0
        %509 = vmatpush1.bf16.msra.mxu0 0
        %510 = vmatprep.subr.bf16.mxu0 0
        %511 = vmatpush1.bf16.msra.mxu0 0
        %512 = vmatprep.subr.bf16.mxu0 0
        %513 = vmatpush1.bf16.msra.mxu0 0
        %514 = vmatprep.subr.bf16.mxu0 0
        %515 = vmatpush1.bf16.msra.mxu0 0
        %516 = vmatprep.subr.bf16.mxu0 0
        %517 = vmatpush1.bf16.msra.mxu0 0
        %518 = vmatprep.subr.bf16.mxu0 0
        %519 = vmatpush1.bf16.msra.mxu0 0
        %520 = vmatprep.subr.bf16.mxu0 0
        %521 = vmatpush1.bf16.msra.mxu0 0
        %522 = vmatprep.subr.bf16.mxu0 0
        %523 = vmatpush1.bf16.msra.mxu0 0
        %524 = vmatprep.subr.bf16.mxu0 0
        %525 = vmatpush1.bf16.msra.mxu0 0
        %526 = vmatprep.mubr.bf16.mxu0 0
        %527 = vmatmul.mubr.bf16.gmra.mrb[0].mxu0 %v444
        %v528 = vpop.f32.mrb[0].mxu0
        %v529 = vadd.f32 0.0, %v528
        %v530 = vpop.f32.mrb[0].mxu0
        %v531 = vpop.f32.mrb[0].mxu0
        %v532 = vadd.f32 0.0, %v531
        %v533 = vpop.f32.mrb[0].mxu0
        %534 = vdwg.mxu0
        %v536 = vsel %vm446, %v431, 0
        %538 = vmatprep.subr.bf16.mxu0 0
        %539 = vmatpush1.bf16.msra.mxu0 %v536
        %540 = vmatprep.subr.bf16.mxu0 0
        %541 = vmatpush1.bf16.msra.mxu0 0
        %542 = vmatprep.subr.bf16.mxu0 0
        %543 = vmatpush1.bf16.msra.mxu0 0
        %544 = vmatprep.subr.bf16.mxu0 0
        %545 = vmatpush1.bf16.msra.mxu0 0
        %546 = vmatprep.subr.bf16.mxu0 0
        %547 = vmatpush1.bf16.msra.mxu0 0
        %548 = vmatprep.subr.bf16.mxu0 0
        %549 = vmatpush1.bf16.msra.mxu0 0
        %550 = vmatprep.subr.bf16.mxu0 0
        %551 = vmatpush1.bf16.msra.mxu0 0
        %552 = vmatprep.subr.bf16.mxu0 0
        %553 = vmatpush1.bf16.msra.mxu0 0
        %554 = vmatprep.subr.bf16.mxu0 0
        %555 = vmatpush1.bf16.msra.mxu0 0
        %556 = vmatprep.subr.bf16.mxu0 0
        %557 = vmatpush1.bf16.msra.mxu0 0
        %558 = vmatprep.subr.bf16.mxu0 0
        %559 = vmatpush1.bf16.msra.mxu0 0
        %560 = vmatprep.subr.bf16.mxu0 0
        %561 = vmatpush1.bf16.msra.mxu0 0
        %562 = vmatprep.subr.bf16.mxu0 0
        %563 = vmatpush1.bf16.msra.mxu0 0
        %564 = vmatprep.subr.bf16.mxu0 0
        %565 = vmatpush1.bf16.msra.mxu0 0
        %566 = vmatprep.subr.bf16.mxu0 0
        %567 = vmatpush1.bf16.msra.mxu0 0
        %568 = vmatprep.subr.bf16.mxu0 0
        %569 = vmatpush1.bf16.msra.mxu0 0
        %570 = vmatprep.mubr.bf16.mxu0 0
        %571 = vmatmul.mubr.bf16.gmra.mrb[0].mxu0 %v444
        %v572 = vpop.f32.mrb[0].mxu0
        %v573 = vadd.f32 0.0, %v572
        %v574 = vpop.f32.mrb[0].mxu0
        %v575 = vpop.f32.mrb[0].mxu0
        %v576 = vadd.f32 0.0, %v575
        %v577 = vpop.f32.mrb[0].mxu0
        %578 = vdwg.mxu0
        %v580 = vsel %vm446, %v432, 0
        %582 = vmatprep.subr.bf16.mxu0 0
        %583 = vmatpush1.bf16.msra.mxu0 %v580
        %584 = vmatprep.subr.bf16.mxu0 0
        %585 = vmatpush1.bf16.msra.mxu0 0
        %586 = vmatprep.subr.bf16.mxu0 0
        %587 = vmatpush1.bf16.msra.mxu0 0
        %588 = vmatprep.subr.bf16.mxu0 0
        %589 = vmatpush1.bf16.msra.mxu0 0
        %590 = vmatprep.subr.bf16.mxu0 0
        %591 = vmatpush1.bf16.msra.mxu0 0
        %592 = vmatprep.subr.bf16.mxu0 0
        %593 = vmatpush1.bf16.msra.mxu0 0
        %594 = vmatprep.subr.bf16.mxu0 0
        %595 = vmatpush1.bf16.msra.mxu0 0
        %596 = vmatprep.subr.bf16.mxu0 0
        %597 = vmatpush1.bf16.msra.mxu0 0
        %598 = vmatprep.subr.bf16.mxu0 0
        %599 = vmatpush1.bf16.msra.mxu0 0
        %600 = vmatprep.subr.bf16.mxu0 0
        %601 = vmatpush1.bf16.msra.mxu0 0
        %602 = vmatprep.subr.bf16.mxu0 0
        %603 = vmatpush1.bf16.msra.mxu0 0
        %604 = vmatprep.subr.bf16.mxu0 0
        %605 = vmatpush1.bf16.msra.mxu0 0
        %606 = vmatprep.subr.bf16.mxu0 0
        %607 = vmatpush1.bf16.msra.mxu0 0
        %608 = vmatprep.subr.bf16.mxu0 0
        %609 = vmatpush1.bf16.msra.mxu0 0
        %610 = vmatprep.subr.bf16.mxu0 0
        %611 = vmatpush1.bf16.msra.mxu0 0
        %612 = vmatprep.subr.bf16.mxu0 0
        %613 = vmatpush1.bf16.msra.mxu0 0
        %614 = vmatprep.mubr.bf16.mxu0 0
        %615 = vmatmul.mubr.bf16.gmra.mrb[0].mxu0 %v444
        %v616 = vpop.f32.mrb[0].mxu0
        %v617 = vadd.f32 0.0, %v616
        %v618 = vpop.f32.mrb[0].mxu0
        %v619 = vpop.f32.mrb[0].mxu0
        %v620 = vadd.f32 0.0, %v619
        %v621 = vpop.f32.mrb[0].mxu0
        %622 = vdwg.mxu0
        %v624 = vsel %vm446, %v433, 0
        %626 = vmatprep.subr.bf16.mxu0 0
        %627 = vmatpush1.bf16.msra.mxu0 %v624
        %628 = vmatprep.subr.bf16.mxu0 0
        %629 = vmatpush1.bf16.msra.mxu0 0
        %630 = vmatprep.subr.bf16.mxu0 0
        %631 = vmatpush1.bf16.msra.mxu0 0
        %632 = vmatprep.subr.bf16.mxu0 0
        %633 = vmatpush1.bf16.msra.mxu0 0
        %634 = vmatprep.subr.bf16.mxu0 0
        %635 = vmatpush1.bf16.msra.mxu0 0
        %636 = vmatprep.subr.bf16.mxu0 0
        %637 = vmatpush1.bf16.msra.mxu0 0
        %638 = vmatprep.subr.bf16.mxu0 0
        %639 = vmatpush1.bf16.msra.mxu0 0
        %640 = vmatprep.subr.bf16.mxu0 0
        %641 = vmatpush1.bf16.msra.mxu0 0
        %642 = vmatprep.subr.bf16.mxu0 0
        %643 = vmatpush1.bf16.msra.mxu0 0
        %644 = vmatprep.subr.bf16.mxu0 0
        %645 = vmatpush1.bf16.msra.mxu0 0
        %646 = vmatprep.subr.bf16.mxu0 0
        %647 = vmatpush1.bf16.msra.mxu0 0
        %648 = vmatprep.subr.bf16.mxu0 0
        %649 = vmatpush1.bf16.msra.mxu0 0
        %650 = vmatprep.subr.bf16.mxu0 0
        %651 = vmatpush1.bf16.msra.mxu0 0
        %652 = vmatprep.subr.bf16.mxu0 0
        %653 = vmatpush1.bf16.msra.mxu0 0
        %654 = vmatprep.subr.bf16.mxu0 0
        %655 = vmatpush1.bf16.msra.mxu0 0
        %656 = vmatprep.subr.bf16.mxu0 0
        %657 = vmatpush1.bf16.msra.mxu0 0
        %658 = vmatprep.mubr.bf16.mxu0 0
        %659 = vmatmul.mubr.bf16.gmra.mrb[0].mxu0 %v444
        %v660 = vpop.f32.mrb[0].mxu0
        %v661 = vadd.f32 0.0, %v660
        %v662 = vpop.f32.mrb[0].mxu0
        %v663 = vpop.f32.mrb[0].mxu0
        %v664 = vadd.f32 0.0, %v663
        %v665 = vpop.f32.mrb[0].mxu0
        %666 = vdwg.mxu0
        %v668 = vsel %vm446, %v434, 0
        %670 = vmatprep.subr.bf16.mxu0 0
        %671 = vmatpush1.bf16.msra.mxu0 %v668
        %672 = vmatprep.subr.bf16.mxu0 0
        %673 = vmatpush1.bf16.msra.mxu0 0
        %674 = vmatprep.subr.bf16.mxu0 0
        %675 = vmatpush1.bf16.msra.mxu0 0
        %676 = vmatprep.subr.bf16.mxu0 0
        %677 = vmatpush1.bf16.msra.mxu0 0
        %678 = vmatprep.subr.bf16.mxu0 0
        %679 = vmatpush1.bf16.msra.mxu0 0
        %680 = vmatprep.subr.bf16.mxu0 0
        %681 = vmatpush1.bf16.msra.mxu0 0
        %682 = vmatprep.subr.bf16.mxu0 0
        %683 = vmatpush1.bf16.msra.mxu0 0
        %684 = vmatprep.subr.bf16.mxu0 0
        %685 = vmatpush1.bf16.msra.mxu0 0
        %686 = vmatprep.subr.bf16.mxu0 0
        %687 = vmatpush1.bf16.msra.mxu0 0
        %688 = vmatprep.subr.bf16.mxu0 0
        %689 = vmatpush1.bf16.msra.mxu0 0
        %690 = vmatprep.subr.bf16.mxu0 0
        %691 = vmatpush1.bf16.msra.mxu0 0
        %692 = vmatprep.subr.bf16.mxu0 0
        %693 = vmatpush1.bf16.msra.mxu0 0
        %694 = vmatprep.subr.bf16.mxu0 0
        %695 = vmatpush1.bf16.msra.mxu0 0
        %696 = vmatprep.subr.bf16.mxu0 0
        %697 = vmatpush1.bf16.msra.mxu0 0
        %698 = vmatprep.subr.bf16.mxu0 0
        %699 = vmatpush1.bf16.msra.mxu0 0
        %700 = vmatprep.subr.bf16.mxu0 0
        %701 = vmatpush1.bf16.msra.mxu0 0
        %702 = vmatprep.mubr.bf16.mxu0 0
        %703 = vmatmul.mubr.bf16.gmra.mrb[0].mxu0 %v444
        %v704 = vpop.f32.mrb[0].mxu0
        %v705 = vadd.f32 0.0, %v704
        %v706 = vpop.f32.mrb[0].mxu0
        %v707 = vpop.f32.mrb[0].mxu0
        %v708 = vadd.f32 0.0, %v707
        %v709 = vpop.f32.mrb[0].mxu0
        %710 = vdwg.mxu0
        %v712 = vsel %vm446, %v435, 0
        %714 = vmatprep.subr.bf16.mxu0 0
        %715 = vmatpush1.bf16.msra.mxu0 %v712
        %716 = vmatprep.subr.bf16.mxu0 0
        %717 = vmatpush1.bf16.msra.mxu0 0
        %718 = vmatprep.subr.bf16.mxu0 0
        %719 = vmatpush1.bf16.msra.mxu0 0
        %720 = vmatprep.subr.bf16.mxu0 0
        %721 = vmatpush1.bf16.msra.mxu0 0
        %722 = vmatprep.subr.bf16.mxu0 0
        %723 = vmatpush1.bf16.msra.mxu0 0
        %724 = vmatprep.subr.bf16.mxu0 0
        %725 = vmatpush1.bf16.msra.mxu0 0
        %726 = vmatprep.subr.bf16.mxu0 0
        %727 = vmatpush1.bf16.msra.mxu0 0
        %728 = vmatprep.subr.bf16.mxu0 0
        %729 = vmatpush1.bf16.msra.mxu0 0
        %730 = vmatprep.subr.bf16.mxu0 0
        %731 = vmatpush1.bf16.msra.mxu0 0
        %732 = vmatprep.subr.bf16.mxu0 0
        %733 = vmatpush1.bf16.msra.mxu0 0
        %734 = vmatprep.subr.bf16.mxu0 0
        %735 = vmatpush1.bf16.msra.mxu0 0
        %736 = vmatprep.subr.bf16.mxu0 0
        %737 = vmatpush1.bf16.msra.mxu0 0
        %738 = vmatprep.subr.bf16.mxu0 0
        %739 = vmatpush1.bf16.msra.mxu0 0
        %740 = vmatprep.subr.bf16.mxu0 0
        %741 = vmatpush1.bf16.msra.mxu0 0
        %742 = vmatprep.subr.bf16.mxu0 0
        %743 = vmatpush1.bf16.msra.mxu0 0
        %744 = vmatprep.subr.bf16.mxu0 0
        %745 = vmatpush1.bf16.msra.mxu0 0
        %746 = vmatprep.mubr.bf16.mxu0 0
        %747 = vmatmul.mubr.bf16.gmra.mrb[0].mxu0 %v444
        %v748 = vpop.f32.mrb[0].mxu0
        %v749 = vadd.f32 0.0, %v748
        %v750 = vpop.f32.mrb[0].mxu0
        %v751 = vpop.f32.mrb[0].mxu0
        %v752 = vadd.f32 0.0, %v751
        %v753 = vpop.f32.mrb[0].mxu0
        %754 = vdwg.mxu0
        %v756 = vsel %vm446, %v436, 0
        %758 = vmatprep.subr.bf16.mxu0 0
        %759 = vmatpush1.bf16.msra.mxu0 %v756
        %760 = vmatprep.subr.bf16.mxu0 0
        %761 = vmatpush1.bf16.msra.mxu0 0
        %762 = vmatprep.subr.bf16.mxu0 0
        %763 = vmatpush1.bf16.msra.mxu0 0
        %764 = vmatprep.subr.bf16.mxu0 0
        %765 = vmatpush1.bf16.msra.mxu0 0
        %766 = vmatprep.subr.bf16.mxu0 0
        %767 = vmatpush1.bf16.msra.mxu0 0
        %768 = vmatprep.subr.bf16.mxu0 0
        %769 = vmatpush1.bf16.msra.mxu0 0
        %770 = vmatprep.subr.bf16.mxu0 0
        %771 = vmatpush1.bf16.msra.mxu0 0
        %772 = vmatprep.subr.bf16.mxu0 0
        %773 = vmatpush1.bf16.msra.mxu0 0
        %774 = vmatprep.subr.bf16.mxu0 0
        %775 = vmatpush1.bf16.msra.mxu0 0
        %776 = vmatprep.subr.bf16.mxu0 0
        %777 = vmatpush1.bf16.msra.mxu0 0
        %778 = vmatprep.subr.bf16.mxu0 0
        %779 = vmatpush1.bf16.msra.mxu0 0
        %780 = vmatprep.subr.bf16.mxu0 0
        %781 = vmatpush1.bf16.msra.mxu0 0
        %782 = vmatprep.subr.bf16.mxu0 0
        %783 = vmatpush1.bf16.msra.mxu0 0
        %784 = vmatprep.subr.bf16.mxu0 0
        %785 = vmatpush1.bf16.msra.mxu0 0
        %786 = vmatprep.subr.bf16.mxu0 0
        %787 = vmatpush1.bf16.msra.mxu0 0
        %788 = vmatprep.subr.bf16.mxu0 0
        %789 = vmatpush1.bf16.msra.mxu0 0
        %790 = vmatprep.mubr.bf16.mxu0 0
        %791 = vmatmul.mubr.bf16.gmra.mrb[0].mxu0 %v444
        %v792 = vpop.f32.mrb[0].mxu0
        %v793 = vadd.f32 0.0, %v792
        %v794 = vpop.f32.mrb[0].mxu0
        %v795 = vpop.f32.mrb[0].mxu0
        %v796 = vadd.f32 0.0, %v795
        %v797 = vpop.f32.mrb[0].mxu0
        %798 = vdwg.mxu0
        %v799 = vpack.c.bf16 %v488, %v485
        %v800 = vpack.c.bf16 %v532, %v529
        %v801 = vpack.c.bf16 %v576, %v573
        %v802 = vpack.c.bf16 %v620, %v617
        %v803 = vpack.c.bf16 %v664, %v661
        %v804 = vpack.c.bf16 %v708, %v705
        %v805 = vpack.c.bf16 %v752, %v749
        %v806 = vpack.c.bf16 %v796, %v793
        %v807 = vld [vmem:[%s4] sm:$0x3]
        %v809 = vsel %vm442, %v799, 0
        %v812 = vsel %vm442, %v800, 0
        %v815 = vsel %vm442, %v801, 0
        %v818 = vsel %vm442, %v802, 0
        %v821 = vsel %vm442, %v803, 0
        %v824 = vsel %vm442, %v804, 0
        %v827 = vsel %vm442, %v805, 0
        %v830 = vsel %vm442, %v806, 0
        %v833 = vsel %vm446, %v807, 0
        %835 = vmatprep.subr.bf16.mxu0 0
        %836 = vmatpush1.bf16.msra.mxu0 %v833
        %837 = vmatprep.subr.bf16.mxu0 0
        %838 = vmatpush1.bf16.msra.mxu0 0
        %839 = vmatprep.subr.bf16.mxu0 0
        %840 = vmatpush1.bf16.msra.mxu0 0
        %841 = vmatprep.subr.bf16.mxu0 0
        %842 = vmatpush1.bf16.msra.mxu0 0
        %843 = vmatprep.subr.bf16.mxu0 0
        %844 = vmatpush1.bf16.msra.mxu0 0
        %845 = vmatprep.subr.bf16.mxu0 0
        %846 = vmatpush1.bf16.msra.mxu0 0
        %847 = vmatprep.subr.bf16.mxu0 0
        %848 = vmatpush1.bf16.msra.mxu0 0
        %849 = vmatprep.subr.bf16.mxu0 0
        %850 = vmatpush1.bf16.msra.mxu0 0
        %851 = vmatprep.subr.bf16.mxu0 0
        %852 = vmatpush1.bf16.msra.mxu0 0
        %853 = vmatprep.subr.bf16.mxu0 0
        %854 = vmatpush1.bf16.msra.mxu0 0
        %855 = vmatprep.subr.bf16.mxu0 0
        %856 = vmatpush1.bf16.msra.mxu0 0
        %857 = vmatprep.subr.bf16.mxu0 0
        %858 = vmatpush1.bf16.msra.mxu0 0
        %859 = vmatprep.subr.bf16.mxu0 0
        %860 = vmatpush1.bf16.msra.mxu0 0
        %861 = vmatprep.subr.bf16.mxu0 0
        %862 = vmatpush1.bf16.msra.mxu0 0
        %863 = vmatprep.subr.bf16.mxu0 0
        %864 = vmatpush1.bf16.msra.mxu0 0
        %865 = vmatprep.subr.bf16.mxu0 0
        %866 = vmatpush1.bf16.msra.mxu0 0
        %867 = vmatprep.mubr.bf16.mxu0 0
        %868 = vmatmul.mubr.bf16.gmra.mrb[0].mxu0 %v809
        %v869 = vpop.f32.mrb[0].mxu0
        %v870 = vadd.f32 0.0, %v869
        %v871 = vpop.f32.mrb[0].mxu0
        %v872 = vpop.f32.mrb[0].mxu0
        %v873 = vadd.f32 0.0, %v872
        %v874 = vpop.f32.mrb[0].mxu0
        %875 = vmatprep.mubr.bf16.mxu0 0
        %876 = vmatmul.mubr.bf16.gmra.mrb[0].mxu0 %v812
        %v877 = vpop.f32.mrb[0].mxu0
        %v878 = vadd.f32 0.0, %v877
        %v879 = vpop.f32.mrb[0].mxu0
        %v880 = vpop.f32.mrb[0].mxu0
        %v881 = vadd.f32 0.0, %v880
        %v882 = vpop.f32.mrb[0].mxu0
        %883 = vmatprep.mubr.bf16.mxu0 0
        %884 = vmatmul.mubr.bf16.gmra.mrb[0].mxu0 %v815
        %v885 = vpop.f32.mrb[0].mxu0
        %v886 = vadd.f32 0.0, %v885
        %v887 = vpop.f32.mrb[0].mxu0
        %v888 = vpop.f32.mrb[0].mxu0
        %v889 = vadd.f32 0.0, %v888
        %v890 = vpop.f32.mrb[0].mxu0
        %891 = vmatprep.mubr.bf16.mxu0 0
        %892 = vmatmul.mubr.bf16.gmra.mrb[0].mxu0 %v818
        %v893 = vpop.f32.mrb[0].mxu0
        %v894 = vadd.f32 0.0, %v893
        %v895 = vpop.f32.mrb[0].mxu0
        %v896 = vpop.f32.mrb[0].mxu0
        %v897 = vadd.f32 0.0, %v896
        %v898 = vpop.f32.mrb[0].mxu0
        %899 = vmatprep.mubr.bf16.mxu0 0
        %900 = vmatmul.mubr.bf16.gmra.mrb[0].mxu0 %v821
        %v901 = vpop.f32.mrb[0].mxu0
        %v902 = vadd.f32 0.0, %v901
        %v903 = vpop.f32.mrb[0].mxu0
        %v904 = vpop.f32.mrb[0].mxu0
        %v905 = vadd.f32 0.0, %v904
        %v906 = vpop.f32.mrb[0].mxu0
        %907 = vmatprep.mubr.bf16.mxu0 0
        %908 = vmatmul.mubr.bf16.gmra.mrb[0].mxu0 %v824
        %v909 = vpop.f32.mrb[0].mxu0
        %v910 = vadd.f32 0.0, %v909
        %v911 = vpop.f32.mrb[0].mxu0
        %v912 = vpop.f32.mrb[0].mxu0
        %v913 = vadd.f32 0.0, %v912
        %v914 = vpop.f32.mrb[0].mxu0
        %915 = vmatprep.mubr.bf16.mxu0 0
        %916 = vmatmul.mubr.bf16.gmra.mrb[0].mxu0 %v827
        %v917 = vpop.f32.mrb[0].mxu0
        %v918 = vadd.f32 0.0, %v917
        %v919 = vpop.f32.mrb[0].mxu0
        %v920 = vpop.f32.mrb[0].mxu0
        %v921 = vadd.f32 0.0, %v920
        %v922 = vpop.f32.mrb[0].mxu0
        %923 = vmatprep.mubr.bf16.mxu0 0
        %924 = vmatmul.mubr.bf16.gmra.mrb[0].mxu0 %v830
        %v925 = vpop.f32.mrb[0].mxu0
        %v926 = vadd.f32 0.0, %v925
        %v927 = vpop.f32.mrb[0].mxu0
        %v928 = vpop.f32.mrb[0].mxu0
        %v929 = vadd.f32 0.0, %v928
        %v930 = vpop.f32.mrb[0].mxu0
        %931 = vdwg.mxu0
        %vm932 = vcmask 130048
        %933 = vst.msk [vmem:[%s247] sm:$0xff] %vm932, %v870
        %934 = vst.msk [vmem:[%s247 + $0x8] sm:$0xff] %vm932, %v873
        %935 = vst.msk [vmem:[%s247 + $0x10] sm:$0xff] %vm932, %v878
        %936 = vst.msk [vmem:[%s247 + $0x18] sm:$0xff] %vm932, %v881
        %937 = vst.msk [vmem:[%s247 + $0x20] sm:$0xff] %vm932, %v886
        %938 = vst.msk [vmem:[%s247 + $0x28] sm:$0xff] %vm932, %v889
        %939 = vst.msk [vmem:[%s247 + $0x30] sm:$0xff] %vm932, %v894
        %940 = vst.msk [vmem:[%s247 + $0x38] sm:$0xff] %vm932, %v897
        %941 = vst.msk [vmem:[%s247 + $0x40] sm:$0xff] %vm932, %v902
        %942 = vst.msk [vmem:[%s247 + $0x48] sm:$0xff] %vm932, %v905
        %943 = vst.msk [vmem:[%s247 + $0x50] sm:$0xff] %vm932, %v910
        %944 = vst.msk [vmem:[%s247 + $0x58] sm:$0xff] %vm932, %v913
        %945 = vst.msk [vmem:[%s247 + $0x60] sm:$0xff] %vm932, %v918
        %946 = vst.msk [vmem:[%s247 + $0x68] sm:$0xff] %vm932, %v921
        %947 = vst.msk [vmem:[%s247 + $0x70] sm:$0xff] %vm932, %v926
        %948 = vst.msk [vmem:[%s247 + $0x78] sm:$0xff] %vm932, %v929
        %s949 = sand.u32 %s156, 1
        %s950 = scalar_lea.sflag [#allocation4], %s949
        %s951 = sand.u32 %s156, 1
        %s952 = smul.addr %s951, 128
        %s953 = scalar_lea.vmem [#allocation3], %s952
        // Predicated region
        $region45: #{tpu_custom_call.1} parent=39 // pred_check
          %p954 = pneg %p166
        $region46: #{tpu_custom_call.1} parent=39 // pred_check_branch
          %956 = sbr.rel (%p954) target = $region48
        $region47: #{tpu_custom_call.1} parent=39 // pred_region
          %s957 = smul.u32 2, %s24
          %s959 = ssub.s32 2048, 2048
          %960 = vsyncadd %s950, %s959
          %s961 = smul.addr %s23, 16
          %s962 = sadd.s32 %s957, %s961
          %s963 = smul.addr %s962, 128
          %s964 = scalar_lea.hbm %s5, %s963
          %s965 = sshll.u32 %s953, 4
          %s966 = int_to_ptr.vmem [resolvable:$true] %s965
          %971 = dma.vmem_to_hbm [thread:$0]  %s966, 2048, %s964, %s950, 128, 128, 8
        $region48: #{tpu_custom_call.1} parent=39 // pred_fallthru
          _
      $region40: #{tpu_custom_call.1} parent=5 // pred_fallthru
        _
      %p972 = scmp.le.s32.totalorder 2, %s14
      // Predicated region
      $region49: #{tpu_custom_call.1} parent=5 // pred_check
        %p973 = pneg %p972
      $region50: #{tpu_custom_call.1} parent=5 // pred_check_branch
        %975 = sbr.rel (%p973) target = $region52
      $region51: #{tpu_custom_call.1} parent=5 // pred_region
        %s976 = ssub.s32 %s14, 2
        // Predicated region
        $region53: #{tpu_custom_call.1} parent=51 // pred_check
          %p977 = pneg %p172
        $region54: #{tpu_custom_call.1} parent=51 // pred_check_branch
          %979 = sbr.rel (%p977) target = $region56
        $region55: #{tpu_custom_call.1} parent=51 // pred_region
          %s980 = sand.u32 %s157, 1
          %s981 = scalar_lea.sflag [#allocation4], %s980
          %s982 = sand.u32 %s157, 1
          %s983 = smul.addr %s982, 128
          %s984 = scalar_lea.vmem [#allocation3], %s983
          %985 = dma.done %s981, 2048
        $region56: #{tpu_custom_call.1} parent=51 // pred_fallthru
          _
      $region52: #{tpu_custom_call.1} parent=5 // pred_fallthru
        _
    $region6: #{tpu_custom_call.1} parent=1 // loop_footer
      %s18 = sadd.s32 1, %s14
    $region7: #{tpu_custom_call.1} parent=1 // loop_footer_branch
      %13 = sbr.rel target = $region3
    $region8: #{tpu_custom_call.1} parent=1 // loop_exit
      _
    %986 = vsyncpa [#allocation4], 1
    %s987 = scalar_lea.sflag [#allocation4], 1
    %988 = vsyncpa %s987, 1

</llo_original>
